<compile_context>
chip_gen: v5e
topology: v5e:2x2
jax: 0.10.0
libtpu: 0.0.40
codegen_flags: <defaults>
</compile_context>

<pallas_src>
import functools

import jax
import jax.numpy as jnp
from jax.experimental import pallas as pl
from jax.experimental.pallas import tpu as pltpu


def _mlp_kernel(xyz_ref, u_ref,
                w1a_ref, w1b_ref, b1_ref,
                w2_ref, b2_ref,
                w3_ref, b3_ref,
                w4_ref, b4_ref,
                out_ref):
    """Transposed MLP: columns are batch samples (lane dim = batch).

    xyz_ref: (3, tile_b)    u_ref: (cd, tile_b)
    wKa/wKb/wK: (out_dim, in_dim)   bK: (out_dim, 1)   out_ref: (3, tile_b)
    """
    # Layer 1: split-input linear (no concat in HBM) + ReLU.  f32 accumulation.
    h = (jnp.dot(w1a_ref[...], xyz_ref[...], preferred_element_type=jnp.float32)
         + jnp.dot(w1b_ref[...], u_ref[...], preferred_element_type=jnp.float32)
         + b1_ref[...])
    h = jnp.maximum(h, 0.0)
    # Layer 2 + ReLU.
    h = jnp.dot(w2_ref[...], h.astype(w2_ref.dtype),
                preferred_element_type=jnp.float32) + b2_ref[...]
    h = jnp.maximum(h, 0.0)
    # Layer 3 + ReLU.
    h = jnp.dot(w3_ref[...], h.astype(w3_ref.dtype),
                preferred_element_type=jnp.float32) + b3_ref[...]
    h = jnp.maximum(h, 0.0)
    # Output layer: (3, tile_b) block written directly (lane-dense, no padding).
    y = jnp.dot(w4_ref[...], h.astype(w4_ref.dtype),
                preferred_element_type=jnp.float32) + b4_ref[...]
    out_ref[...] = y.astype(out_ref.dtype)


@functools.partial(jax.jit, static_argnames=("tile_b", "matmul_dtype"))
def residual_net_forward(xyz, u, params, *, tile_b=8192, matmul_dtype=jnp.float32):
    """xyz: (B, 3), u: (B, control_dim). Returns (B, 3) delta-xyz (float32)."""
    xyz = xyz.astype(jnp.float32)
    u = u.astype(jnp.float32)

    B = xyz.shape[0]
    D_xyz = xyz.shape[1]                      # 3
    D_u = u.shape[1]                          # control_dim

    (w1, b1), (w2, b2), (w3, b3), (w4, b4) = params
    H1, H2, H3 = w1.shape[1], w2.shape[1], w3.shape[1]
    D_out = w4.shape[1]                       # 3

    # --- transposed I/O: batch becomes the lane (fast) dimension ---------------
    xyz_t = xyz.T.astype(matmul_dtype)        # (3, B)
    u_t = u.T.astype(matmul_dtype)            # (cd, B)

    # Pre-transposed weights (out_dim, in_dim); split first layer (no concat).
    w1a_t = w1[:D_xyz, :].T.astype(matmul_dtype)   # (H1, 3)
    w1b_t = w1[D_xyz:, :].T.astype(matmul_dtype)   # (H1, cd)
    w2_t = w2.T.astype(matmul_dtype)               # (H2, H1)
    w3_t = w3.T.astype(matmul_dtype)               # (H3, H2)
    w4_t = w4.T.astype(matmul_dtype)               # (3, H3)
    # Biases stay f32 (post-matmul math always f32; v5e has no bf16 VPU).
    b1_t = b1.reshape(-1, 1).astype(jnp.float32)   # (H1, 1)
    b2_t = b2.reshape(-1, 1).astype(jnp.float32)   # (H2, 1)
    b3_t = b3.reshape(-1, 1).astype(jnp.float32)   # (H3, 1)
    b4_t = b4.reshape(-1, 1).astype(jnp.float32)   # (3, 1)

    # --- batch tiling: big tiles, no wrapper-side padding -----------------------
    # tile_b must be a multiple of 128 (lane dim) unless it equals the full B.
    tile_b = max(128, (int(tile_b) // 128) * 128)
    if B <= tile_b:
        tile_b = B                            # single full block (legal: == array dim)
    n_tiles = pl.cdiv(B, tile_b)              # partial last block handled by Pallas

    def _w_spec(shape):
        # grid-invariant block: loaded once, resident in VMEM across all steps
        return pl.BlockSpec(shape, lambda i: (0, 0))

    out_t = pl.pallas_call(
        _mlp_kernel,
        out_shape=jax.ShapeDtypeStruct((D_out, B), jnp.float32),
        grid_spec=pltpu.PrefetchScalarGridSpec(
            num_scalar_prefetch=0,
            grid=(n_tiles,),
            in_specs=[
                pl.BlockSpec((D_xyz, tile_b), lambda i: (0, i)),   # xyz tile
                pl.BlockSpec((D_u, tile_b),   lambda i: (0, i)),   # u tile
                _w_spec((H1, D_xyz)), _w_spec((H1, D_u)), _w_spec((H1, 1)),
                _w_spec((H2, H1)),  _w_spec((H2, 1)),
                _w_spec((H3, H2)),  _w_spec((H3, 1)),
                _w_spec((D_out, H3)), _w_spec((D_out, 1)),
            ],
            out_specs=pl.BlockSpec((D_out, tile_b), lambda i: (0, i)),
        ),
        compiler_params=pltpu.CompilerParams(
            dimension_semantics=("parallel",)),   # shards batch tiles across TCs on v7x
    )(xyz_t, u_t,
      w1a_t, w1b_t, b1_t,
      w2_t, b2_t,
      w3_t, b3_t,
      w4_t, b4_t)

    # back to (B, 3); cheap (B*3 elements)
    return out_t.T


def init_params(key, control_dim, hidden_sizes=(64, 64, 64)):
    """Deterministic init mimicking nn.Linear's uniform(-1/sqrt(fan_in), 1/sqrt(fan_in))."""
    dims = [3 + control_dim, *hidden_sizes, 3]
    params = []
    for i in range(len(dims) - 1):
        fan_in, fan_out = dims[i], dims[i + 1]
        key, kw, kb = jax.random.split(key, 3)
        bound = 1.0 / jnp.sqrt(float(fan_in))
        w = jax.random.uniform(kw, (fan_in, fan_out), jnp.float32, -bound, bound)
        b = jax.random.uniform(kb, (1, fan_out), jnp.float32, -bound, bound)
        params.append((w, b))
    return params


def _reference_forward(xyz, u, params):
    x = jnp.concatenate([xyz.astype(jnp.float32), u.astype(jnp.float32)], axis=-1)
    for i, (w, b) in enumerate(params):
        x = x @ w + b
        if i < len(params) - 1:
            x = jnp.maximum(x, 0.0)
    return x


if __name__ == "__main__":
    key = jax.random.PRNGKey(0)
    control_dim = 5

    k_params, k_xyz, k_u = jax.random.split(key, 3)
    params = init_params(k_params, control_dim)

    # Case 1: small batch -> single full block (block lane dim == full array dim).
    batch = 16
    xyz = jax.random.normal(k_xyz, (batch, 3), jnp.float32)
    u = jax.random.normal(k_u, (batch, control_dim), jnp.float32)
    out = jax.block_until_ready(residual_net_forward(xyz, u, params))
    ref = _reference_forward(xyz, u, params)
    assert out.shape == (batch, 3)
    assert jnp.allclose(out, ref, atol=1e-4, rtol=1e-4)

    # Case 2: multi-tile, non-divisible batch -> cdiv grid + Pallas partial-block
    # handling (no wrapper-side padding; OOB batch columns are independent and their
    # output writes are dropped).
    batch2 = 300
    k_xyz2, k_u2 = jax.random.split(jax.random.PRNGKey(1))
    xyz2 = jax.random.normal(k_xyz2, (batch2, 3), jnp.float32)
    u2 = jax.random.normal(k_u2, (batch2, control_dim), jnp.float32)
    out2 = jax.block_until_ready(residual_net_forward(xyz2, u2, params, tile_b=128))
    ref2 = _reference_forward(xyz2, u2, params)
    assert out2.shape == (batch2, 3)
    assert jnp.allclose(out2, ref2, atol=1e-4, rtol=1e-4)

    print("KERNEL_OK")
</pallas_src>

<mosaic_0001>
module attributes {stable_mosaic.version = 11 : i64} {
  func.func @_mlp_kernel(%arg0: i32, %arg1: memref<3x16xf32, #tpu.memory_space<vmem>>, %arg2: memref<5x16xf32, #tpu.memory_space<vmem>>, %arg3: memref<64x3xf32, #tpu.memory_space<vmem>>, %arg4: memref<64x5xf32, #tpu.memory_space<vmem>>, %arg5: memref<64x1xf32, #tpu.memory_space<vmem>>, %arg6: memref<64x64xf32, #tpu.memory_space<vmem>>, %arg7: memref<64x1xf32, #tpu.memory_space<vmem>>, %arg8: memref<64x64xf32, #tpu.memory_space<vmem>>, %arg9: memref<64x1xf32, #tpu.memory_space<vmem>>, %arg10: memref<3x64xf32, #tpu.memory_space<vmem>>, %arg11: memref<3x1xf32, #tpu.memory_space<vmem>>, %arg12: memref<3x16xf32, #tpu.memory_space<vmem>>) attributes {dimension_semantics = [#tpu.dimension_semantics<parallel>], iteration_bounds = array<i64: 1>, scalar_prefetch = 0 : i64, scratch_operands = 0 : i64, tpu.core_type = #tpu.core_type<tc>, window_params = [{transform_indices = @transform_0, window_bounds = array<i64: 3, 16>}, {transform_indices = @transform_1, window_bounds = array<i64: 5, 16>}, {pipeline_mode = #tpu.pipeline_mode<synchronous>, transform_indices = @transform_2, window_bounds = array<i64: 64, 3>}, {pipeline_mode = #tpu.pipeline_mode<synchronous>, transform_indices = @transform_3, window_bounds = array<i64: 64, 5>}, {pipeline_mode = #tpu.pipeline_mode<synchronous>, transform_indices = @transform_4, window_bounds = array<i64: 64, 1>}, {pipeline_mode = #tpu.pipeline_mode<synchronous>, transform_indices = @transform_5, window_bounds = array<i64: 64, 64>}, {pipeline_mode = #tpu.pipeline_mode<synchronous>, transform_indices = @transform_6, window_bounds = array<i64: 64, 1>}, {pipeline_mode = #tpu.pipeline_mode<synchronous>, transform_indices = @transform_7, window_bounds = array<i64: 64, 64>}, {pipeline_mode = #tpu.pipeline_mode<synchronous>, transform_indices = @transform_8, window_bounds = array<i64: 64, 1>}, {pipeline_mode = #tpu.pipeline_mode<synchronous>, transform_indices = @transform_9, window_bounds = array<i64: 3, 64>}, {pipeline_mode = #tpu.pipeline_mode<synchronous>, transform_indices = @transform_10, window_bounds = array<i64: 3, 1>}, {transform_indices = @transform_11, window_bounds = array<i64: 3, 16>}]} {
    %c0 = arith.constant 0 : index
    %c0_0 = arith.constant 0 : index
    %0 = vector.load %arg3[%c0, %c0_0] : memref<64x3xf32, #tpu.memory_space<vmem>>, vector<64x3xf32>
    %c0_1 = arith.constant 0 : index
    %c0_2 = arith.constant 0 : index
    %1 = vector.load %arg1[%c0_1, %c0_2] : memref<3x16xf32, #tpu.memory_space<vmem>>, vector<3x16xf32>
    %cst = arith.constant dense<0.000000e+00> : vector<64x16xf32>
    %2 = tpu.matmul %0, %1, %cst {dimension_numbers = #tpu.dot_dimension_numbers<[1], [0], [0], [1], [0, 0, 1, 1], [], []>} : vector<64x3xf32>, vector<3x16xf32>, vector<64x16xf32> -> vector<64x16xf32>
    %c0_3 = arith.constant 0 : index
    %c0_4 = arith.constant 0 : index
    %3 = vector.load %arg4[%c0_3, %c0_4] : memref<64x5xf32, #tpu.memory_space<vmem>>, vector<64x5xf32>
    %c0_5 = arith.constant 0 : index
    %c0_6 = arith.constant 0 : index
    %4 = vector.load %arg2[%c0_5, %c0_6] : memref<5x16xf32, #tpu.memory_space<vmem>>, vector<5x16xf32>
    %cst_7 = arith.constant dense<0.000000e+00> : vector<64x16xf32>
    %5 = tpu.matmul %3, %4, %cst_7 {dimension_numbers = #tpu.dot_dimension_numbers<[1], [0], [0], [1], [0, 0, 1, 1], [], []>} : vector<64x5xf32>, vector<5x16xf32>, vector<64x16xf32> -> vector<64x16xf32>
    %6 = arith.addf %2, %5 : vector<64x16xf32>
    %c0_8 = arith.constant 0 : index
    %c0_9 = arith.constant 0 : index
    %7 = vector.load %arg5[%c0_8, %c0_9] : memref<64x1xf32, #tpu.memory_space<vmem>>, vector<64x1xf32>
    %8 = vector.broadcast %7 : vector<64x1xf32> to vector<64x16xf32>
    %9 = arith.addf %6, %8 : vector<64x16xf32>
    %cst_10 = arith.constant 0.000000e+00 : f32
    %10 = vector.broadcast %cst_10 : f32 to vector<64x16xf32>
    %11 = arith.maximumf %9, %10 : vector<64x16xf32>
    %c0_11 = arith.constant 0 : index
    %c0_12 = arith.constant 0 : index
    %12 = vector.load %arg6[%c0_11, %c0_12] : memref<64x64xf32, #tpu.memory_space<vmem>>, vector<64x64xf32>
    %cst_13 = arith.constant dense<0.000000e+00> : vector<64x16xf32>
    %13 = tpu.matmul %12, %11, %cst_13 {dimension_numbers = #tpu.dot_dimension_numbers<[1], [0], [0], [1], [0, 0, 1, 1], [], []>} : vector<64x64xf32>, vector<64x16xf32>, vector<64x16xf32> -> vector<64x16xf32>
    %c0_14 = arith.constant 0 : index
    %c0_15 = arith.constant 0 : index
    %14 = vector.load %arg7[%c0_14, %c0_15] : memref<64x1xf32, #tpu.memory_space<vmem>>, vector<64x1xf32>
    %15 = vector.broadcast %14 : vector<64x1xf32> to vector<64x16xf32>
    %16 = arith.addf %13, %15 : vector<64x16xf32>
    %cst_16 = arith.constant 0.000000e+00 : f32
    %17 = vector.broadcast %cst_16 : f32 to vector<64x16xf32>
    %18 = arith.maximumf %16, %17 : vector<64x16xf32>
    %c0_17 = arith.constant 0 : index
    %c0_18 = arith.constant 0 : index
    %19 = vector.load %arg8[%c0_17, %c0_18] : memref<64x64xf32, #tpu.memory_space<vmem>>, vector<64x64xf32>
    %cst_19 = arith.constant dense<0.000000e+00> : vector<64x16xf32>
    %20 = tpu.matmul %19, %18, %cst_19 {dimension_numbers = #tpu.dot_dimension_numbers<[1], [0], [0], [1], [0, 0, 1, 1], [], []>} : vector<64x64xf32>, vector<64x16xf32>, vector<64x16xf32> -> vector<64x16xf32>
    %c0_20 = arith.constant 0 : index
    %c0_21 = arith.constant 0 : index
    %21 = vector.load %arg9[%c0_20, %c0_21] : memref<64x1xf32, #tpu.memory_space<vmem>>, vector<64x1xf32>
    %22 = vector.broadcast %21 : vector<64x1xf32> to vector<64x16xf32>
    %23 = arith.addf %20, %22 : vector<64x16xf32>
    %cst_22 = arith.constant 0.000000e+00 : f32
    %24 = vector.broadcast %cst_22 : f32 to vector<64x16xf32>
    %25 = arith.maximumf %23, %24 : vector<64x16xf32>
    %c0_23 = arith.constant 0 : index
    %c0_24 = arith.constant 0 : index
    %26 = vector.load %arg10[%c0_23, %c0_24] : memref<3x64xf32, #tpu.memory_space<vmem>>, vector<3x64xf32>
    %cst_25 = arith.constant dense<0.000000e+00> : vector<3x16xf32>
    %27 = tpu.matmul %26, %25, %cst_25 {dimension_numbers = #tpu.dot_dimension_numbers<[1], [0], [0], [1], [0, 0, 1, 1], [], []>} : vector<3x64xf32>, vector<64x16xf32>, vector<3x16xf32> -> vector<3x16xf32>
    %c0_26 = arith.constant 0 : index
    %c0_27 = arith.constant 0 : index
    %28 = vector.load %arg11[%c0_26, %c0_27] : memref<3x1xf32, #tpu.memory_space<vmem>>, vector<3x1xf32>
    %29 = vector.broadcast %28 : vector<3x1xf32> to vector<3x16xf32>
    %30 = arith.addf %27, %29 : vector<3x16xf32>
    %c0_28 = arith.constant 0 : index
    %c0_29 = arith.constant 0 : index
    %31 = vector.load %arg12[%c0_28, %c0_29] : memref<3x16xf32, #tpu.memory_space<vmem>>, vector<3x16xf32>
    tpu.vector_store %arg12[%c0_28, %c0_29], %30 {strides = array<i32>} : memref<3x16xf32, #tpu.memory_space<vmem>>, vector<3x16xf32>,
    return
  }
  func.func @transform_0(%arg0: i32) -> (i32, i32) {
    %c0_i32 = arith.constant 0 : i32
    %c0_i32_0 = arith.constant 0 : i32
    return %c0_i32, %arg0 : i32, i32
  }
  func.func @transform_1(%arg0: i32) -> (i32, i32) {
    %c0_i32 = arith.constant 0 : i32
    %c0_i32_0 = arith.constant 0 : i32
    return %c0_i32, %arg0 : i32, i32
  }
  func.func @transform_2(%arg0: i32) -> (i32, i32) {
    %c0_i32 = arith.constant 0 : i32
    %c0_i32_0 = arith.constant 0 : i32
    %c0_i32_1 = arith.constant 0 : i32
    return %c0_i32, %c0_i32_0 : i32, i32
  }
  func.func @transform_3(%arg0: i32) -> (i32, i32) {
    %c0_i32 = arith.constant 0 : i32
    %c0_i32_0 = arith.constant 0 : i32
    %c0_i32_1 = arith.constant 0 : i32
    return %c0_i32, %c0_i32_0 : i32, i32
  }
  func.func @transform_4(%arg0: i32) -> (i32, i32) {
    %c0_i32 = arith.constant 0 : i32
    %c0_i32_0 = arith.constant 0 : i32
    %c0_i32_1 = arith.constant 0 : i32
    return %c0_i32, %c0_i32_0 : i32, i32
  }
  func.func @transform_5(%arg0: i32) -> (i32, i32) {
    %c0_i32 = arith.constant 0 : i32
    %c0_i32_0 = arith.constant 0 : i32
    %c0_i32_1 = arith.constant 0 : i32
    return %c0_i32, %c0_i32_0 : i32, i32
  }
  func.func @transform_6(%arg0: i32) -> (i32, i32) {
    %c0_i32 = arith.constant 0 : i32
    %c0_i32_0 = arith.constant 0 : i32
    %c0_i32_1 = arith.constant 0 : i32
    return %c0_i32, %c0_i32_0 : i32, i32
  }
  func.func @transform_7(%arg0: i32) -> (i32, i32) {
    %c0_i32 = arith.constant 0 : i32
    %c0_i32_0 = arith.constant 0 : i32
    %c0_i32_1 = arith.constant 0 : i32
    return %c0_i32, %c0_i32_0 : i32, i32
  }
  func.func @transform_8(%arg0: i32) -> (i32, i32) {
    %c0_i32 = arith.constant 0 : i32
    %c0_i32_0 = arith.constant 0 : i32
    %c0_i32_1 = arith.constant 0 : i32
    return %c0_i32, %c0_i32_0 : i32, i32
  }
  func.func @transform_9(%arg0: i32) -> (i32, i32) {
    %c0_i32 = arith.constant 0 : i32
    %c0_i32_0 = arith.constant 0 : i32
    %c0_i32_1 = arith.constant 0 : i32
    return %c0_i32, %c0_i32_0 : i32, i32
  }
  func.func @transform_10(%arg0: i32) -> (i32, i32) {
    %c0_i32 = arith.constant 0 : i32
    %c0_i32_0 = arith.constant 0 : i32
    %c0_i32_1 = arith.constant 0 : i32
    return %c0_i32, %c0_i32_0 : i32, i32
  }
  func.func @transform_11(%arg0: i32) -> (i32, i32) {
    %c0_i32 = arith.constant 0 : i32
    %c0_i32_0 = arith.constant 0 : i32
    return %c0_i32, %arg0 : i32, i32
  }
}

</mosaic_0001>

<llo_original>
// kernel: residual_net_forward.1
$region0: #{residual_net_forward.1}
  #allocation0 [shape = 'u32[]', space=smem, size = 0x4, offset = 0x4, fixed_abs, tag = 'smem constant byte address 0x4 - core index']
  #allocation1 [shape = 'u32[72,128]{1,0:T(1,128)}', space=vmem, size = 0x9000, scoped, tag = 'internal scratch']
  %s0 = inlined_call_operand.vmem [shape: f32[3,16], index: 0, kind: input, shape index: {}]
  %s1 = inlined_call_operand.vmem [shape: f32[5,16], index: 1, kind: input, shape index: {}]
  %s2 = inlined_call_operand.vmem [shape: f32[64,3], index: 2, kind: input, shape index: {}]
  %s3 = inlined_call_operand.vmem [shape: f32[64,5], index: 3, kind: input, shape index: {}]
  %s4 = inlined_call_operand.vmem [shape: f32[64,1], index: 4, kind: input, shape index: {}]
  %s5 = inlined_call_operand.vmem [shape: f32[64,64], index: 5, kind: input, shape index: {}]
  %s6 = inlined_call_operand.vmem [shape: f32[64,1], index: 6, kind: input, shape index: {}]
  %s7 = inlined_call_operand.vmem [shape: f32[64,64], index: 7, kind: input, shape index: {}]
  %s8 = inlined_call_operand.vmem [shape: f32[64,1], index: 8, kind: input, shape index: {}]
  %s9 = inlined_call_operand.vmem [shape: f32[3,64], index: 9, kind: input, shape index: {}]
  %s10 = inlined_call_operand.vmem [shape: f32[3,1], index: 10, kind: input, shape index: {}]
  %s11 = inlined_call_operand.hbm [shape: f32[3,16], index: 11, kind: output, shape index: {}]
  %s12 = sld [smem:[#allocation0]]
  $region54: #{residual_net_forward.1} parent=0
    _
  %s14 = ssub.s32 1, %s12
  %s15 = scalar_select 0, %s14, %s12
  $region1: #{residual_net_forward.1} parent=0
    #allocation2 [shape = 'u8[2048]{0}', space=vmem, size = 0x800, scoped, tag = 'output window, operand 0, single buffered']
    #allocation3 [shape = 's32[1]{0}', space=sflag, size = 0x4, scoped, tag = 'scoped memory for residual_net_forward.1']
    %16 = vsyncpa [#allocation3], 0
    // Predicated region
    $region2: #{residual_net_forward.1} parent=1 // pred_check
      _
    $region3: #{residual_net_forward.1} parent=1 // pred_check_branch
      %18 = sbr.rel (0) target = $region5
    $region4: #{residual_net_forward.1} parent=1 // pred_region
      _
    $region5: #{residual_net_forward.1} parent=1 // pred_fallthru
      _
    // Predicated region
    $region6: #{residual_net_forward.1} parent=1 // pred_check
      _
    $region7: #{residual_net_forward.1} parent=1 // pred_check_branch
      %20 = sbr.rel (0) target = $region9
    $region8: #{residual_net_forward.1} parent=1 // pred_region
      _
    $region9: #{residual_net_forward.1} parent=1 // pred_fallthru
      _
    // Predicated region
    $region10: #{residual_net_forward.1} parent=1 // pred_check
      _
    $region11: #{residual_net_forward.1} parent=1 // pred_check_branch
      %22 = sbr.rel (0) target = $region13
    $region12: #{residual_net_forward.1} parent=1 // pred_region
      _
    $region13: #{residual_net_forward.1} parent=1 // pred_fallthru
      _
    // Predicated region
    $region14: #{residual_net_forward.1} parent=1 // pred_check
      _
    $region15: #{residual_net_forward.1} parent=1 // pred_check_branch
      %24 = sbr.rel (0) target = $region17
    $region16: #{residual_net_forward.1} parent=1 // pred_region
      _
    $region17: #{residual_net_forward.1} parent=1 // pred_fallthru
      _
    // Predicated region
    $region18: #{residual_net_forward.1} parent=1 // pred_check
      _
    $region19: #{residual_net_forward.1} parent=1 // pred_check_branch
      %26 = sbr.rel (0) target = $region21
    $region20: #{residual_net_forward.1} parent=1 // pred_region
      _
    $region21: #{residual_net_forward.1} parent=1 // pred_fallthru
      _
    // Predicated region
    $region22: #{residual_net_forward.1} parent=1 // pred_check
      _
    $region23: #{residual_net_forward.1} parent=1 // pred_check_branch
      %28 = sbr.rel (0) target = $region25
    $region24: #{residual_net_forward.1} parent=1 // pred_region
      _
    $region25: #{residual_net_forward.1} parent=1 // pred_fallthru
      _
    // Predicated region
    $region26: #{residual_net_forward.1} parent=1 // pred_check
      _
    $region27: #{residual_net_forward.1} parent=1 // pred_check_branch
      %30 = sbr.rel (0) target = $region29
    $region28: #{residual_net_forward.1} parent=1 // pred_region
      _
    $region29: #{residual_net_forward.1} parent=1 // pred_fallthru
      _
    // Predicated region
    $region30: #{residual_net_forward.1} parent=1 // pred_check
      _
    $region31: #{residual_net_forward.1} parent=1 // pred_check_branch
      %32 = sbr.rel (0) target = $region33
    $region32: #{residual_net_forward.1} parent=1 // pred_region
      _
    $region33: #{residual_net_forward.1} parent=1 // pred_fallthru
      _
    // Predicated region
    $region34: #{residual_net_forward.1} parent=1 // pred_check
      _
    $region35: #{residual_net_forward.1} parent=1 // pred_check_branch
      %34 = sbr.rel (0) target = $region37
    $region36: #{residual_net_forward.1} parent=1 // pred_region
      _
    $region37: #{residual_net_forward.1} parent=1 // pred_fallthru
      _
    // Predicated region
    $region38: #{residual_net_forward.1} parent=1 // pred_check
      _
    $region39: #{residual_net_forward.1} parent=1 // pred_check_branch
      %36 = sbr.rel (0) target = $region41
    $region40: #{residual_net_forward.1} parent=1 // pred_region
      _
    $region41: #{residual_net_forward.1} parent=1 // pred_fallthru
      _
    // Predicated region
    $region42: #{residual_net_forward.1} parent=1 // pred_check
      _
    $region43: #{residual_net_forward.1} parent=1 // pred_check_branch
      %38 = sbr.rel (0) target = $region45
    $region44: #{residual_net_forward.1} parent=1 // pred_region
      _
    $region45: #{residual_net_forward.1} parent=1 // pred_fallthru
      _
    %v39 = vld [vmem:[%s2] sm:$0xff]
    %v40 = vld [vmem:[%s2 + $0x8] sm:$0xff]
    %v41 = vld [vmem:[%s2 + $0x10] sm:$0xff]
    %v42 = vld [vmem:[%s2 + $0x18] sm:$0xff]
    %v43 = vld [vmem:[%s2 + $0x20] sm:$0xff]
    %v44 = vld [vmem:[%s2 + $0x28] sm:$0xff]
    %v45 = vld [vmem:[%s2 + $0x30] sm:$0xff]
    %v46 = vld [vmem:[%s2 + $0x38] sm:$0xff]
    %v47 = vld [vmem:[%s0] sm:$0x7]
    %v48 = vld [vmem:[%s3] sm:$0xff]
    %v49 = vld [vmem:[%s3 + $0x8] sm:$0xff]
    %v50 = vld [vmem:[%s3 + $0x10] sm:$0xff]
    %v51 = vld [vmem:[%s3 + $0x18] sm:$0xff]
    %v52 = vld [vmem:[%s3 + $0x20] sm:$0xff]
    %v53 = vld [vmem:[%s3 + $0x28] sm:$0xff]
    %v54 = vld [vmem:[%s3 + $0x30] sm:$0xff]
    %v55 = vld [vmem:[%s3 + $0x38] sm:$0xff]
    %v56 = vld [vmem:[%s1] sm:$0x1f]
    %vm57 = vcmask 39936
    %v59 = vsel %vm57, %v48, 0
    %v62 = vsel %vm57, %v49, 0
    %v65 = vsel %vm57, %v50, 0
    %v68 = vsel %vm57, %v51, 0
    %v71 = vsel %vm57, %v52, 0
    %v74 = vsel %vm57, %v53, 0
    %v77 = vsel %vm57, %v54, 0
    %v80 = vsel %vm57, %v55, 0
    %vm82 = vcmask 1044480
    %v84 = vsel %vm82, %v56, 0
    %86 = vmatpush.msra.mxu0 0.0
    %87 = vmatpush.msra.mxu0 0.0
    %88 = vmatpush.msra.mxu0 0.0
    %89 = vmatpush.msra.mxu0 0.0
    %90 = vmatpush.msra.mxu0 0.0
    %91 = vmatpush.msra.mxu0 0.0
    %92 = vmatpush.msra.mxu0 0.0
    %93 = vmatpush.msra.mxu0 0.0
    %94 = vmatpush.msra.mxu0 0.0
    %95 = vmatpush.msra.mxu0 0.0
    %96 = vmatpush.msra.mxu0 0.0
    %97 = vmatpush.msra.mxu0 0.0
    %98 = vmatpush.msra.mxu0 0.0
    %99 = vmatpush.msra.mxu0 0.0
    %100 = vmatpush.msra.mxu0 0.0
    %101 = vmatpush.msra.mxu0 %v84
    %102 = vmatmul.f32.gmra.mxu0 %v59
    %v103 = vpop.f32.mrf.mxu0
    %v104 = vadd.f32 0.0, %v103
    %105 = vmatmul.f32.gmra.mxu0 %v62
    %v106 = vpop.f32.mrf.mxu0
    %v107 = vadd.f32 0.0, %v106
    %108 = vmatmul.f32.gmra.mxu0 %v65
    %v109 = vpop.f32.mrf.mxu0
    %v110 = vadd.f32 0.0, %v109
    %111 = vmatmul.f32.gmra.mxu0 %v68
    %v112 = vpop.f32.mrf.mxu0
    %v113 = vadd.f32 0.0, %v112
    %114 = vmatmul.f32.gmra.mxu0 %v71
    %v115 = vpop.f32.mrf.mxu0
    %v116 = vadd.f32 0.0, %v115
    %117 = vmatmul.f32.gmra.mxu0 %v74
    %v118 = vpop.f32.mrf.mxu0
    %v119 = vadd.f32 0.0, %v118
    %120 = vmatmul.f32.gmra.mxu0 %v77
    %v121 = vpop.f32.mrf.mxu0
    %v122 = vadd.f32 0.0, %v121
    %123 = vmatmul.f32.gmra.mxu0 %v80
    %v124 = vpop.f32.mrf.mxu0
    %v125 = vadd.f32 0.0, %v124
    %126 = vdwg.mxu0
    %vm127 = vcmask 23552
    %v129 = vsel %vm127, %v39, 0
    %v132 = vsel %vm127, %v40, 0
    %v135 = vsel %vm127, %v41, 0
    %v138 = vsel %vm127, %v42, 0
    %v141 = vsel %vm127, %v43, 0
    %v144 = vsel %vm127, %v44, 0
    %v147 = vsel %vm127, %v45, 0
    %v150 = vsel %vm127, %v46, 0
    %vm152 = vcmask 1042432
    %v154 = vsel %vm152, %v47, 0
    %156 = vmatpush.msra.mxu0 0.0
    %157 = vmatpush.msra.mxu0 0.0
    %158 = vmatpush.msra.mxu0 0.0
    %159 = vmatpush.msra.mxu0 0.0
    %160 = vmatpush.msra.mxu0 0.0
    %161 = vmatpush.msra.mxu0 0.0
    %162 = vmatpush.msra.mxu0 0.0
    %163 = vmatpush.msra.mxu0 0.0
    %164 = vmatpush.msra.mxu0 0.0
    %165 = vmatpush.msra.mxu0 0.0
    %166 = vmatpush.msra.mxu0 0.0
    %167 = vmatpush.msra.mxu0 0.0
    %168 = vmatpush.msra.mxu0 0.0
    %169 = vmatpush.msra.mxu0 0.0
    %170 = vmatpush.msra.mxu0 0.0
    %171 = vmatpush.msra.mxu0 %v154
    %172 = vmatmul.f32.gmra.mxu0 %v129
    %v173 = vpop.f32.mrf.mxu0
    %v174 = vadd.f32 %v104, %v173
    %175 = vmatmul.f32.gmra.mxu0 %v132
    %v176 = vpop.f32.mrf.mxu0
    %v177 = vadd.f32 %v107, %v176
    %178 = vmatmul.f32.gmra.mxu0 %v135
    %v179 = vpop.f32.mrf.mxu0
    %v180 = vadd.f32 %v110, %v179
    %181 = vmatmul.f32.gmra.mxu0 %v138
    %v182 = vpop.f32.mrf.mxu0
    %v183 = vadd.f32 %v113, %v182
    %184 = vmatmul.f32.gmra.mxu0 %v141
    %v185 = vpop.f32.mrf.mxu0
    %v186 = vadd.f32 %v116, %v185
    %187 = vmatmul.f32.gmra.mxu0 %v144
    %v188 = vpop.f32.mrf.mxu0
    %v189 = vadd.f32 %v119, %v188
    %190 = vmatmul.f32.gmra.mxu0 %v147
    %v191 = vpop.f32.mrf.mxu0
    %v192 = vadd.f32 %v122, %v191
    %193 = vmatmul.f32.gmra.mxu0 %v150
    %v194 = vpop.f32.mrf.mxu0
    %v195 = vadd.f32 %v125, %v194
    %196 = vdwg.mxu0
    %v197 = vld [vmem:[%s4] sm:$0xff]
    %v198 = vld [vmem:[%s4 + $0x8] sm:$0xff]
    %v199 = vld [vmem:[%s4 + $0x10] sm:$0xff]
    %v200 = vld [vmem:[%s4 + $0x18] sm:$0xff]
    %v201 = vld [vmem:[%s4 + $0x20] sm:$0xff]
    %v202 = vld [vmem:[%s4 + $0x28] sm:$0xff]
    %v203 = vld [vmem:[%s4 + $0x30] sm:$0xff]
    %v204 = vld [vmem:[%s4 + $0x38] sm:$0xff]
    %206 = vset.pattern.permute.xlu0 0
    %207 = vperm.xlu0 %206, %v197
    %v208 = vpop.permute.xlu0 %207
    %211 = vset.pattern.permute.xlu0 0
    %212 = vperm.xlu0 %211, %v198
    %v213 = vpop.permute.xlu0 %212
    %216 = vset.pattern.permute.xlu0 0
    %217 = vperm.xlu0 %216, %v199
    %v218 = vpop.permute.xlu0 %217
    %221 = vset.pattern.permute.xlu0 0
    %222 = vperm.xlu0 %221, %v200
    %v223 = vpop.permute.xlu0 %222
    %226 = vset.pattern.permute.xlu0 0
    %227 = vperm.xlu0 %226, %v201
    %v228 = vpop.permute.xlu0 %227
    %231 = vset.pattern.permute.xlu0 0
    %232 = vperm.xlu0 %231, %v202
    %v233 = vpop.permute.xlu0 %232
    %236 = vset.pattern.permute.xlu0 0
    %237 = vperm.xlu0 %236, %v203
    %v238 = vpop.permute.xlu0 %237
    %241 = vset.pattern.permute.xlu0 0
    %242 = vperm.xlu0 %241, %v204
    %v243 = vpop.permute.xlu0 %242
    %v245 = vadd.f32 %v174, %v208
    %v246 = vadd.f32 %v177, %v213
    %v247 = vadd.f32 %v180, %v218
    %v248 = vadd.f32 %v183, %v223
    %v249 = vadd.f32 %v186, %v228
    %v250 = vadd.f32 %v189, %v233
    %v251 = vadd.f32 %v192, %v238
    %v252 = vadd.f32 %v195, %v243
    %v253 = vmax.f32 %v245, 0.0
    %v254 = vmax.f32 %v246, 0.0
    %v255 = vmax.f32 %v247, 0.0
    %v256 = vmax.f32 %v248, 0.0
    %v257 = vmax.f32 %v249, 0.0
    %v258 = vmax.f32 %v250, 0.0
    %v259 = vmax.f32 %v251, 0.0
    %v260 = vmax.f32 %v252, 0.0
    %v261 = vld [vmem:[%s5] sm:$0xff]
    %v262 = vld [vmem:[%s5 + $0x8] sm:$0xff]
    %v263 = vld [vmem:[%s5 + $0x10] sm:$0xff]
    %v264 = vld [vmem:[%s5 + $0x18] sm:$0xff]
    %v265 = vld [vmem:[%s5 + $0x20] sm:$0xff]
    %v266 = vld [vmem:[%s5 + $0x28] sm:$0xff]
    %v267 = vld [vmem:[%s5 + $0x30] sm:$0xff]
    %v268 = vld [vmem:[%s5 + $0x38] sm:$0xff]
    %v269 = vld [vmem:[%s6] sm:$0xff]
    %v270 = vld [vmem:[%s6 + $0x8] sm:$0xff]
    %v271 = vld [vmem:[%s6 + $0x10] sm:$0xff]
    %v272 = vld [vmem:[%s6 + $0x18] sm:$0xff]
    %v273 = vld [vmem:[%s6 + $0x20] sm:$0xff]
    %v274 = vld [vmem:[%s6 + $0x28] sm:$0xff]
    %v275 = vld [vmem:[%s6 + $0x30] sm:$0xff]
    %v276 = vld [vmem:[%s6 + $0x38] sm:$0xff]
    %278 = vset.pattern.permute.xlu0 0
    %279 = vperm.xlu0 %278, %v269
    %v280 = vpop.permute.xlu0 %279
    %283 = vset.pattern.permute.xlu0 0
    %284 = vperm.xlu0 %283, %v270
    %v285 = vpop.permute.xlu0 %284
    %288 = vset.pattern.permute.xlu0 0
    %289 = vperm.xlu0 %288, %v271
    %v290 = vpop.permute.xlu0 %289
    %293 = vset.pattern.permute.xlu0 0
    %294 = vperm.xlu0 %293, %v272
    %v295 = vpop.permute.xlu0 %294
    %298 = vset.pattern.permute.xlu0 0
    %299 = vperm.xlu0 %298, %v273
    %v300 = vpop.permute.xlu0 %299
    %303 = vset.pattern.permute.xlu0 0
    %304 = vperm.xlu0 %303, %v274
    %v305 = vpop.permute.xlu0 %304
    %308 = vset.pattern.permute.xlu0 0
    %309 = vperm.xlu0 %308, %v275
    %v310 = vpop.permute.xlu0 %309
    %313 = vset.pattern.permute.xlu0 0
    %314 = vperm.xlu0 %313, %v276
    %v315 = vpop.permute.xlu0 %314
    %vm317 = vcmask 523264
    %v319 = vsel %vm317, %v261, 0
    %v322 = vsel %vm317, %v262, 0
    %v325 = vsel %vm317, %v263, 0
    %v328 = vsel %vm317, %v264, 0
    %v331 = vsel %vm317, %v265, 0
    %v334 = vsel %vm317, %v266, 0
    %v337 = vsel %vm317, %v267, 0
    %v340 = vsel %vm317, %v268, 0
    %342 = vmatpush.msra.mxu0 0.0
    %343 = vmatpush.msra.mxu0 0.0
    %344 = vmatpush.msra.mxu0 0.0
    %345 = vmatpush.msra.mxu0 0.0
    %346 = vmatpush.msra.mxu0 0.0
    %347 = vmatpush.msra.mxu0 0.0
    %348 = vmatpush.msra.mxu0 0.0
    %349 = vmatpush.msra.mxu0 0.0
    %350 = vmatpush.msra.mxu0 %v260
    %351 = vmatpush.msra.mxu0 %v259
    %352 = vmatpush.msra.mxu0 %v258
    %353 = vmatpush.msra.mxu0 %v257
    %354 = vmatpush.msra.mxu0 %v256
    %355 = vmatpush.msra.mxu0 %v255
    %356 = vmatpush.msra.mxu0 %v254
    %357 = vmatpush.msra.mxu0 %v253
    %358 = vmatmul.f32.gmra.mxu0 %v319
    %v359 = vpop.f32.mrf.mxu0
    %v360 = vadd.f32 %v280, %v359
    %361 = vmatmul.f32.gmra.mxu0 %v322
    %v362 = vpop.f32.mrf.mxu0
    %v363 = vadd.f32 %v285, %v362
    %364 = vmatmul.f32.gmra.mxu0 %v325
    %v365 = vpop.f32.mrf.mxu0
    %v366 = vadd.f32 %v290, %v365
    %367 = vmatmul.f32.gmra.mxu0 %v328
    %v368 = vpop.f32.mrf.mxu0
    %v369 = vadd.f32 %v295, %v368
    %370 = vmatmul.f32.gmra.mxu0 %v331
    %v371 = vpop.f32.mrf.mxu0
    %v372 = vadd.f32 %v300, %v371
    %373 = vmatmul.f32.gmra.mxu0 %v334
    %v374 = vpop.f32.mrf.mxu0
    %v375 = vadd.f32 %v305, %v374
    %376 = vmatmul.f32.gmra.mxu0 %v337
    %v377 = vpop.f32.mrf.mxu0
    %v378 = vadd.f32 %v310, %v377
    %379 = vmatmul.f32.gmra.mxu0 %v340
    %v380 = vpop.f32.mrf.mxu0
    %v381 = vadd.f32 %v315, %v380
    %382 = vdwg.mxu0
    %v383 = vmax.f32 %v360, 0.0
    %v384 = vmax.f32 %v363, 0.0
    %v385 = vmax.f32 %v366, 0.0
    %v386 = vmax.f32 %v369, 0.0
    %v387 = vmax.f32 %v372, 0.0
    %v388 = vmax.f32 %v375, 0.0
    %v389 = vmax.f32 %v378, 0.0
    %v390 = vmax.f32 %v381, 0.0
    %v391 = vld [vmem:[%s7] sm:$0xff]
    %v392 = vld [vmem:[%s7 + $0x8] sm:$0xff]
    %v393 = vld [vmem:[%s7 + $0x10] sm:$0xff]
    %v394 = vld [vmem:[%s7 + $0x18] sm:$0xff]
    %v395 = vld [vmem:[%s7 + $0x20] sm:$0xff]
    %v396 = vld [vmem:[%s7 + $0x28] sm:$0xff]
    %v397 = vld [vmem:[%s7 + $0x30] sm:$0xff]
    %v398 = vld [vmem:[%s7 + $0x38] sm:$0xff]
    %v399 = vld [vmem:[%s8] sm:$0xff]
    %v400 = vld [vmem:[%s8 + $0x8] sm:$0xff]
    %v401 = vld [vmem:[%s8 + $0x10] sm:$0xff]
    %v402 = vld [vmem:[%s8 + $0x18] sm:$0xff]
    %v403 = vld [vmem:[%s8 + $0x20] sm:$0xff]
    %v404 = vld [vmem:[%s8 + $0x28] sm:$0xff]
    %v405 = vld [vmem:[%s8 + $0x30] sm:$0xff]
    %v406 = vld [vmem:[%s8 + $0x38] sm:$0xff]
    %408 = vset.pattern.permute.xlu0 0
    %409 = vperm.xlu0 %408, %v399
    %v410 = vpop.permute.xlu0 %409
    %413 = vset.pattern.permute.xlu0 0
    %414 = vperm.xlu0 %413, %v400
    %v415 = vpop.permute.xlu0 %414
    %418 = vset.pattern.permute.xlu0 0
    %419 = vperm.xlu0 %418, %v401
    %v420 = vpop.permute.xlu0 %419
    %423 = vset.pattern.permute.xlu0 0
    %424 = vperm.xlu0 %423, %v402
    %v425 = vpop.permute.xlu0 %424
    %428 = vset.pattern.permute.xlu0 0
    %429 = vperm.xlu0 %428, %v403
    %v430 = vpop.permute.xlu0 %429
    %433 = vset.pattern.permute.xlu0 0
    %434 = vperm.xlu0 %433, %v404
    %v435 = vpop.permute.xlu0 %434
    %438 = vset.pattern.permute.xlu0 0
    %439 = vperm.xlu0 %438, %v405
    %v440 = vpop.permute.xlu0 %439
    %443 = vset.pattern.permute.xlu0 0
    %444 = vperm.xlu0 %443, %v406
    %v445 = vpop.permute.xlu0 %444
    %v448 = vsel %vm317, %v391, 0
    %v451 = vsel %vm317, %v392, 0
    %v454 = vsel %vm317, %v393, 0
    %v457 = vsel %vm317, %v394, 0
    %v460 = vsel %vm317, %v395, 0
    %v463 = vsel %vm317, %v396, 0
    %v466 = vsel %vm317, %v397, 0
    %v469 = vsel %vm317, %v398, 0
    %471 = vmatpush.msra.mxu0 0.0
    %472 = vmatpush.msra.mxu0 0.0
    %473 = vmatpush.msra.mxu0 0.0
    %474 = vmatpush.msra.mxu0 0.0
    %475 = vmatpush.msra.mxu0 0.0
    %476 = vmatpush.msra.mxu0 0.0
    %477 = vmatpush.msra.mxu0 0.0
    %478 = vmatpush.msra.mxu0 0.0
    %479 = vmatpush.msra.mxu0 %v390
    %480 = vmatpush.msra.mxu0 %v389
    %481 = vmatpush.msra.mxu0 %v388
    %482 = vmatpush.msra.mxu0 %v387
    %483 = vmatpush.msra.mxu0 %v386
    %484 = vmatpush.msra.mxu0 %v385
    %485 = vmatpush.msra.mxu0 %v384
    %486 = vmatpush.msra.mxu0 %v383
    %487 = vmatmul.f32.gmra.mxu0 %v448
    %v488 = vpop.f32.mrf.mxu0
    %v489 = vadd.f32 %v410, %v488
    %490 = vmatmul.f32.gmra.mxu0 %v451
    %v491 = vpop.f32.mrf.mxu0
    %v492 = vadd.f32 %v415, %v491
    %493 = vmatmul.f32.gmra.mxu0 %v454
    %v494 = vpop.f32.mrf.mxu0
    %v495 = vadd.f32 %v420, %v494
    %496 = vmatmul.f32.gmra.mxu0 %v457
    %v497 = vpop.f32.mrf.mxu0
    %v498 = vadd.f32 %v425, %v497
    %499 = vmatmul.f32.gmra.mxu0 %v460
    %v500 = vpop.f32.mrf.mxu0
    %v501 = vadd.f32 %v430, %v500
    %502 = vmatmul.f32.gmra.mxu0 %v463
    %v503 = vpop.f32.mrf.mxu0
    %v504 = vadd.f32 %v435, %v503
    %505 = vmatmul.f32.gmra.mxu0 %v466
    %v506 = vpop.f32.mrf.mxu0
    %v507 = vadd.f32 %v440, %v506
    %508 = vmatmul.f32.gmra.mxu0 %v469
    %v509 = vpop.f32.mrf.mxu0
    %v510 = vadd.f32 %v445, %v509
    %511 = vdwg.mxu0
    %v512 = vmax.f32 %v489, 0.0
    %v513 = vmax.f32 %v492, 0.0
    %v514 = vmax.f32 %v495, 0.0
    %v515 = vmax.f32 %v498, 0.0
    %v516 = vmax.f32 %v501, 0.0
    %v517 = vmax.f32 %v504, 0.0
    %v518 = vmax.f32 %v507, 0.0
    %v519 = vmax.f32 %v510, 0.0
    %v520 = vld [vmem:[%s9] sm:$0x7]
    %v521 = vld [vmem:[%s10] sm:$0x7]
    %523 = vset.pattern.permute.xlu0 0
    %524 = vperm.xlu0 %523, %v521
    %v525 = vpop.permute.xlu0 %524
    %v528 = vsel %vm317, %v520, 0
    %530 = vmatpush.msra.mxu0 0.0
    %531 = vmatpush.msra.mxu0 0.0
    %532 = vmatpush.msra.mxu0 0.0
    %533 = vmatpush.msra.mxu0 0.0
    %534 = vmatpush.msra.mxu0 0.0
    %535 = vmatpush.msra.mxu0 0.0
    %536 = vmatpush.msra.mxu0 0.0
    %537 = vmatpush.msra.mxu0 0.0
    %538 = vmatpush.msra.mxu0 %v519
    %539 = vmatpush.msra.mxu0 %v518
    %540 = vmatpush.msra.mxu0 %v517
    %541 = vmatpush.msra.mxu0 %v516
    %542 = vmatpush.msra.mxu0 %v515
    %543 = vmatpush.msra.mxu0 %v514
    %544 = vmatpush.msra.mxu0 %v513
    %545 = vmatpush.msra.mxu0 %v512
    %546 = vmatmul.f32.gmra.mxu0 %v528
    %v547 = vpop.f32.mrf.mxu0
    %v548 = vadd.f32 %v525, %v547
    %549 = vdwg.mxu0
    %vm550 = vcmask 124928
    %551 = vst.msk [vmem:[#allocation2] sm:$0x7] %vm550, %v548
    // Predicated region
    $region46: #{residual_net_forward.1} parent=1 // pred_check
      _
    $region47: #{residual_net_forward.1} parent=1 // pred_check_branch
      %553 = sbr.rel (0) target = $region49
    $region48: #{residual_net_forward.1} parent=1 // pred_region
      %555 = vsyncadd [#allocation3], 0
      %s557 = sshll.u32 [#allocation2], 4
      %s558 = int_to_ptr.vmem [resolvable:$true] %s557
      %s559 = sshll.u32 %s11, 4
      %s560 = int_to_ptr.hbm [resolvable:$true] %s559
      %562 = dma.vmem_to_hbm [thread:$0]  %s558, 64, %s560, [#allocation3]
    $region49: #{residual_net_forward.1} parent=1 // pred_fallthru
      _
    // Predicated region
    $region50: #{residual_net_forward.1} parent=1 // pred_check
      _
    $region51: #{residual_net_forward.1} parent=1 // pred_check_branch
      %564 = sbr.rel (0) target = $region53
    $region52: #{residual_net_forward.1} parent=1 // pred_region
      %566 = dma.done [#allocation3], 64
    $region53: #{residual_net_forward.1} parent=1 // pred_fallthru
      _
    %567 = vsyncpa [#allocation3], 1

</llo_original>
